<compile_context>
chip_gen: v6e
topology: v6e:2x2x1
jax: 0.10.0
libtpu: 0.0.40
codegen_flags: <defaults>
</compile_context>

<pallas_src>
import jax
import jax.numpy as jnp
from jax.experimental import pallas as pl
from jax.experimental.pallas import tpu as pltpu


# ----------------------------------------------------------------------------
# Pallas kernel: one aligned MXU dot per spatial tile (NCHW-native layout).
# ----------------------------------------------------------------------------
def _fused_proj_kernel(w_ref, b_ref, xcat_ref, o_ref):
    # w_ref    : (COUT, K)     resident transposed weight, K = CX + 6*CIM
    # b_ref    : (COUT, 1)     bias (lane-broadcast)
    # xcat_ref : (1, K, TS)    packed channel-major input tile
    # o_ref    : (1, COUT, TS) lane-dense output tile
    acc = jnp.dot(w_ref[...], xcat_ref[0],
                  preferred_element_type=jnp.float32)
    acc = acc + b_ref[...]
    o_ref[0] = jnp.maximum(acc, 0.0).astype(o_ref.dtype)


def _pick_spatial_tile(hw, max_tile, min_spatial_steps=4):
    """Lane-aligned (multiple of 128) spatial tile.

    Largest tile <= max_tile, then shrunk (in 128-lane steps) until the
    spatial axis has at least `min_spatial_steps` grid steps when hw allows —
    enough for the pipeline to prefetch and for both v7x TCs to stay busy.
    Never returns more than max(hw, 128); the last tile may be ragged.
    """
    if hw <= 128:
        return hw                      # full-extent tile; nothing to split
    ts = min(max_tile, hw)
    ts -= ts % 128
    ts = max(ts, 128)
    while ts > 128 and pl.cdiv(hw, ts) < min_spatial_steps:
        ts -= 128
    return ts


def fused_projection_nchw(x, ims, w_t, b, *, max_spatial_tile=8192):
    """x: (B,CX,H,W), ims: 6x (B,CIM,H,W), w_t: (COUT, CX+6*CIM), b: (COUT,).

    Returns relu(1x1-conv(concat([x]+ims, channel))) with shape (B,COUT,H,W).
    """
    B, cx, H, W = x.shape
    hw = H * W
    cim = ims[0].shape[1]
    cout, k_total = w_t.shape
    assert k_total == cx + 6 * cim

    # One-time channel packing (single aligned K=28 contraction in-kernel,
    # one input DMA per grid step).  Contiguous NCHW -> (B, K, H*W) reshape is
    # free; the concat is the only extra copy and disappears if the producer
    # emits the packed tensor directly.
    xcat = jnp.concatenate((x,) + tuple(ims), axis=1).reshape(B, k_total, hw)
    xcat = xcat.astype(x.dtype)
    w2 = w_t.astype(x.dtype)
    b2 = b.reshape(cout, 1).astype(jnp.float32)

    ts = _pick_spatial_tile(hw, max_spatial_tile)
    n_spatial = pl.cdiv(hw, ts)        # ragged last tile OK (Pallas masks)

    out = pl.pallas_call(
        _fused_proj_kernel,
        out_shape=jax.ShapeDtypeStruct((B, cout, hw), x.dtype),
        grid_spec=pltpu.PrefetchScalarGridSpec(
            num_scalar_prefetch=0,
            grid=(B, n_spatial),
            in_specs=[
                pl.BlockSpec((cout, k_total), lambda bi, si: (0, 0)),   # W
                pl.BlockSpec((cout, 1), lambda bi, si: (0, 0)),         # bias
                pl.BlockSpec((1, k_total, ts), lambda bi, si: (bi, 0, si)),
            ],
            out_specs=pl.BlockSpec((1, cout, ts), lambda bi, si: (bi, 0, si)),
        ),
        compiler_params=pltpu.CompilerParams(
            dimension_semantics=("parallel", "parallel"),
            vmem_limit_bytes=32 * 1024 * 1024,
        ),
    )(w2, b2, xcat)

    return out.reshape(B, cout, H, W)


# ----------------------------------------------------------------------------
# The inner module (synthetic, deterministic weights) + the wrapper.
# ----------------------------------------------------------------------------
def make_inner_module(cin_x, cin_im, cout, key):
    """Wrapped `module`: 1x1 conv over concat([x, im0..im5]) + ReLU."""
    k_total = cin_x + 6 * cin_im
    kw, kb = jax.random.split(key)
    w_t = (jax.random.normal(kw, (cout, k_total), jnp.float32)
           / jnp.sqrt(jnp.float32(k_total)))
    b = 0.01 * jax.random.normal(kb, (cout,), jnp.float32)

    def inner(x, im0, im1, im2, im3, im4, im5):
        return fused_projection_nchw(x, (im0, im1, im2, im3, im4, im5), w_t, b)

    return inner, (w_t, b)


def module_wrapper_ignores_6rd_arg(module, x, im0, im1, im2, im3, im4, im5,
                                   dummy_arg=None):
    """Exact semantics of ModuleWrapperIgnores6rdArg.forward."""
    assert dummy_arg is not None
    return module(x, im0, im1, im2, im3, im4, im5)


# ----------------------------------------------------------------------------
if __name__ == "__main__":
    key = jax.random.PRNGKey(0)
    k_params, k_x, *k_ims = jax.random.split(key, 9)

    B, H, W = 2, 16, 16
    CX, CIM, COUT = 4, 4, 8

    x = jax.random.normal(k_x, (B, CX, H, W), jnp.float32)
    ims = [jax.random.normal(k_ims[i], (B, CIM, H, W), jnp.float32)
           for i in range(6)]
    dummy = jnp.ones((1,), jnp.float32)   # the dummy_arg that must be non-None

    inner, (w_t, b) = make_inner_module(CX, CIM, COUT, k_params)

    out = module_wrapper_ignores_6rd_arg(inner, x, *ims, dummy_arg=dummy)
    out = jax.block_until_ready(out)

    # Pure-JAX reference for the same inner module (correctness check).
    cat = jnp.concatenate([x] + ims, axis=1)                 # (B, K, H, W)
    ref = jnp.einsum('ok,bkhw->bohw', w_t, cat)
    ref = jnp.maximum(ref + b[None, :, None, None], 0.0)

    assert out.shape == (B, COUT, H, W)
    assert jnp.allclose(out, ref, atol=1e-4, rtol=1e-4), \
        float(jnp.max(jnp.abs(out - ref)))

    print("KERNEL_OK")
</pallas_src>

<mosaic_0001>
module attributes {stable_mosaic.version = 11 : i64} {
  func.func @_fused_proj_kernel(%arg0: i32, %arg1: i32, %arg2: memref<8x28xf32, #tpu.memory_space<vmem>>, %arg3: memref<8x1xf32, #tpu.memory_space<vmem>>, %arg4: memref<1x28x128xf32, #tpu.memory_space<vmem>>, %arg5: memref<1x8x128xf32, #tpu.memory_space<vmem>>) attributes {dimension_semantics = [#tpu.dimension_semantics<parallel>, #tpu.dimension_semantics<parallel>], iteration_bounds = array<i64: 2, 2>, scalar_prefetch = 0 : i64, scratch_operands = 0 : i64, tpu.core_type = #tpu.core_type<tc>, window_params = [{pipeline_mode = #tpu.pipeline_mode<synchronous>, transform_indices = @transform_0, window_bounds = array<i64: 8, 28>}, {pipeline_mode = #tpu.pipeline_mode<synchronous>, transform_indices = @transform_1, window_bounds = array<i64: 8, 1>}, {transform_indices = @transform_2, window_bounds = array<i64: 1, 28, 128>}, {transform_indices = @transform_3, window_bounds = array<i64: 1, 8, 128>}]} {
    %c0 = arith.constant 0 : index
    %c0_0 = arith.constant 0 : index
    %0 = vector.load %arg2[%c0, %c0_0] : memref<8x28xf32, #tpu.memory_space<vmem>>, vector<8x28xf32>
    %c0_1 = arith.constant 0 : index
    %c0_2 = arith.constant 0 : index
    %c0_3 = arith.constant 0 : index
    %1 = vector.load %arg4[%c0_1, %c0_2, %c0_3] : memref<1x28x128xf32, #tpu.memory_space<vmem>>, vector<1x28x128xf32>
    %2 = vector.shape_cast %1 : vector<1x28x128xf32> to vector<28x128xf32>
    %cst = arith.constant dense<0.000000e+00> : vector<8x128xf32>
    %3 = tpu.matmul %0, %2, %cst {dimension_numbers = #tpu.dot_dimension_numbers<[1], [0], [0], [1], [0, 0, 1, 1], [], []>} : vector<8x28xf32>, vector<28x128xf32>, vector<8x128xf32> -> vector<8x128xf32>
    %c0_4 = arith.constant 0 : index
    %c0_5 = arith.constant 0 : index
    %4 = vector.load %arg3[%c0_4, %c0_5] : memref<8x1xf32, #tpu.memory_space<vmem>>, vector<8x1xf32>
    %5 = vector.broadcast %4 : vector<8x1xf32> to vector<8x128xf32>
    %6 = arith.addf %3, %5 : vector<8x128xf32>
    %cst_6 = arith.constant 0.000000e+00 : f32
    %7 = vector.broadcast %cst_6 : f32 to vector<8x128xf32>
    %8 = arith.maximumf %6, %7 : vector<8x128xf32>
    %c0_7 = arith.constant 0 : index
    %c0_8 = arith.constant 0 : index
    %c0_9 = arith.constant 0 : index
    %9 = vector.load %arg5[%c0_7, %c0_8, %c0_9] : memref<1x8x128xf32, #tpu.memory_space<vmem>>, vector<1x8x128xf32>
    %10 = vector.shape_cast %9 : vector<1x8x128xf32> to vector<8x128xf32>
    %11 = vector.shape_cast %8 : vector<8x128xf32> to vector<1x8x128xf32>
    tpu.vector_store %arg5[%c0_7, %c0_8, %c0_9], %11 {strides = array<i32>} : memref<1x8x128xf32, #tpu.memory_space<vmem>>, vector<1x8x128xf32>,
    return
  }
  func.func @transform_0(%arg0: i32, %arg1: i32) -> (i32, i32) {
    %c0_i32 = arith.constant 0 : i32
    %c0_i32_0 = arith.constant 0 : i32
    %c0_i32_1 = arith.constant 0 : i32
    return %c0_i32, %c0_i32_0 : i32, i32
  }
  func.func @transform_1(%arg0: i32, %arg1: i32) -> (i32, i32) {
    %c0_i32 = arith.constant 0 : i32
    %c0_i32_0 = arith.constant 0 : i32
    %c0_i32_1 = arith.constant 0 : i32
    return %c0_i32, %c0_i32_0 : i32, i32
  }
  func.func @transform_2(%arg0: i32, %arg1: i32) -> (i32, i32, i32) {
    %c0_i32 = arith.constant 0 : i32
    %c0_i32_0 = arith.constant 0 : i32
    return %arg0, %c0_i32, %arg1 : i32, i32, i32
  }
  func.func @transform_3(%arg0: i32, %arg1: i32) -> (i32, i32, i32) {
    %c0_i32 = arith.constant 0 : i32
    %c0_i32_0 = arith.constant 0 : i32
    return %arg0, %c0_i32, %arg1 : i32, i32, i32
  }
}

</mosaic_0001>

<llo_original>
// kernel: tpu_custom_call.1
$region0: #{tpu_custom_call.1}
  #allocation0 [shape = 'u32[]', space=smem, size = 0x4, offset = 0x4, fixed_abs, tag = 'smem constant byte address 0x4 - core index']
  #allocation1 [shape = 'u32[144,128]{1,0:T(1,128)}', space=vmem, size = 0x12000, scoped, tag = 'internal scratch']
  %s0 = inlined_call_operand.vmem [shape: f32[8,28], index: 0, kind: input, shape index: {}]
  %s1 = inlined_call_operand.vmem [shape: f32[8,1], index: 1, kind: input, shape index: {}]
  %s2 = inlined_call_operand.vmem [shape: f32[2,28,256], index: 2, kind: input, shape index: {}]
  %s3 = inlined_call_operand.hbm [shape: f32[2,8,256], index: 3, kind: output, shape index: {}]
  %s4 = sld [smem:[#allocation0]]
  $region83: #{tpu_custom_call.1} parent=0
    _
  %s6 = ssub.s32 1, %s4
  %s7 = scalar_select 0, %s6, %s4
  $region1: #{tpu_custom_call.1} parent=0
    #allocation2 [shape = 'u8[32768]{0}', space=vmem, size = 0x8000, scoped, tag = 'input window, operand 2']
    #allocation3 [shape = 'u8[8192]{0}', space=vmem, size = 0x2000, scoped, tag = 'output window, operand 0']
    #allocation4 [shape = 's32[2]{0}', space=sflag, size = 0x8, scoped, tag = 'scoped memory for tpu_custom_call.1']
    %8 = vsyncpa [#allocation4], 0
    %s9 = scalar_lea.sflag [#allocation4], 1
    %10 = vsyncpa %s9, 0
    loop: start=0, step=1, limit=6
    $region2: #{tpu_custom_call.1} parent=1 // loop_pre_header
      _
    $region3: #{tpu_custom_call.1} parent=1 // loop_header
      %s12 = sphi 0, %s16
      %p13 = scmp.ge.s32.totalorder %s12, 6
      %s19 = sphi 0, %s31
      %s20 = sphi 0, %s27
      %s21 = sphi 0, %s19
      %s22 = sphi 0, %s20
      %s23 = sphi 0, %s21
      %s24 = sphi 0, %s22
      %s32 = sphi 0, %s32
      %s34 = sphi 0, %s32
      %s35 = sphi 0, %s34
      %s49 = sphi 0, %s35
      %s53 = sphi 0, %s53
      %s55 = sphi 0, %s53
      %s56 = sphi 0, %s55
      %s70 = sphi 0, %s56
      %s78 = sphi 0, %s80
      %s81 = sphi 0, %s78
      %s82 = sphi 0, %s81
      %s98 = sphi 0, %s82
      %s106 = sphi 0, %s108
      %s109 = sphi 0, %s106
      %s110 = sphi 0, %s109
      %s126 = sphi 0, %s110
    $region4: #{tpu_custom_call.1} parent=1 // loop_header_branch
      %15 = sbr.rel (%p13) target = $region8
    $region5: #{tpu_custom_call.1} parent=1 // loop_body
      %s17 = ssub.s32 %s12, 1
      %s18 = ssub.s32 %s12, 2
      %s25 = sadd.s32 1, %s20
      %p26 = scmp.ge.s32.totalorder %s25, 2
      %s27 = scalar_select %p26, 0, %s25
      %s28 = sadd.s32 1, %s19
      %s29 = scalar_select %p26, %s28, %s19
      %p30 = scmp.ge.s32.totalorder %s29, 2
      %s31 = scalar_select %p30, 0, %s29
      %s33 = sadd.s32 %s32, 1
      %p36 = scmp.eq.s32.totalorder %s12, 3
      %p37 = scmp.ne.s32.totalorder %s32, %s34
      %p38 = scmp.eq.s32.totalorder %s12, 0
      %p39 = por %p37, %p38
      %p40 = scmp.ne.s32.totalorder %s32, %s34
      %p41 = scmp.eq.s32.totalorder %s17, 3
      %p42 = por %p40, %p41
      %p43 = scmp.ne.s32.totalorder %s34, %s35
      %p44 = scmp.eq.s32.totalorder %s17, 0
      %p45 = por %p43, %p44
      %p46 = scmp.ne.s32.totalorder %s34, %s35
      %p47 = scmp.eq.s32.totalorder %s18, 3
      %p48 = por %p46, %p47
      %p50 = scmp.ne.s32.totalorder %s35, %s49
      %p51 = scmp.eq.s32.totalorder %s18, 0
      %p52 = por %p50, %p51
      %s54 = sadd.s32 %s53, 1
      %p57 = scmp.eq.s32.totalorder %s12, 3
      %p58 = scmp.ne.s32.totalorder %s53, %s55
      %p59 = scmp.eq.s32.totalorder %s12, 0
      %p60 = por %p58, %p59
      %p61 = scmp.ne.s32.totalorder %s53, %s55
      %p62 = scmp.eq.s32.totalorder %s17, 3
      %p63 = por %p61, %p62
      %p64 = scmp.ne.s32.totalorder %s55, %s56
      %p65 = scmp.eq.s32.totalorder %s17, 0
      %p66 = por %p64, %p65
      %p67 = scmp.ne.s32.totalorder %s55, %s56
      %p68 = scmp.eq.s32.totalorder %s18, 3
      %p69 = por %p67, %p68
      %p71 = scmp.ne.s32.totalorder %s56, %s70
      %p72 = scmp.eq.s32.totalorder %s18, 0
      %p73 = por %p71, %p72
      %s74 = ssub.s32 %s19, %s31
      %s75 = ssub.s32 %s20, %s27
      %s76 = sor.u32 %s74, %s75
      %p77 = scmp.eq.s32.totalorder %s76, 0
      %s79 = sadd.s32 %s78, 1
      %s80 = scalar_select %p77, %s78, %s79
      %p83 = pneg %p77
      %p84 = scmp.eq.s32.totalorder %s12, 3
      %p85 = por %p83, %p84
      %p86 = scmp.ne.s32.totalorder %s78, %s81
      %p87 = scmp.eq.s32.totalorder %s12, 0
      %p88 = por %p86, %p87
      %p89 = scmp.ne.s32.totalorder %s78, %s81
      %p90 = scmp.eq.s32.totalorder %s17, 3
      %p91 = por %p89, %p90
      %p92 = scmp.ne.s32.totalorder %s81, %s82
      %p93 = scmp.eq.s32.totalorder %s17, 0
      %p94 = por %p92, %p93
      %p95 = scmp.ne.s32.totalorder %s81, %s82
      %p96 = scmp.eq.s32.totalorder %s18, 3
      %p97 = por %p95, %p96
      %p99 = scmp.ne.s32.totalorder %s82, %s98
      %p100 = scmp.eq.s32.totalorder %s18, 0
      %p101 = por %p99, %p100
      %s102 = ssub.s32 %s19, %s31
      %s103 = ssub.s32 %s20, %s27
      %s104 = sor.u32 %s102, %s103
      %p105 = scmp.eq.s32.totalorder %s104, 0
      %s107 = sadd.s32 %s106, 1
      %s108 = scalar_select %p105, %s106, %s107
      %p111 = pneg %p105
      %p112 = scmp.eq.s32.totalorder %s12, 3
      %p113 = por %p111, %p112
      %p114 = scmp.ne.s32.totalorder %s106, %s109
      %p115 = scmp.eq.s32.totalorder %s12, 0
      %p116 = por %p114, %p115
      %p117 = scmp.ne.s32.totalorder %s106, %s109
      %p118 = scmp.eq.s32.totalorder %s17, 3
      %p119 = por %p117, %p118
      %p120 = scmp.ne.s32.totalorder %s109, %s110
      %p121 = scmp.eq.s32.totalorder %s17, 0
      %p122 = por %p120, %p121
      %p123 = scmp.ne.s32.totalorder %s109, %s110
      %p124 = scmp.eq.s32.totalorder %s18, 3
      %p125 = por %p123, %p124
      %p127 = scmp.ne.s32.totalorder %s110, %s126
      %p128 = scmp.eq.s32.totalorder %s18, 0
      %p129 = por %p127, %p128
      %p130 = scmp.le.s32.totalorder 1, %s12
      %p131 = scmp.lt.s32.totalorder %s12, 5
      %p132 = pnand %p130, %p131
      %p133 = pneg %p132
      // Predicated region
      $region9: #{tpu_custom_call.1} parent=5 // pred_check
        _
      $region10: #{tpu_custom_call.1} parent=5 // pred_check_branch
        %135 = sbr.rel (%p132) target = $region12
      $region11: #{tpu_custom_call.1} parent=5 // pred_region
        %s136 = ssub.s32 %s12, 1
        // Predicated region
        $region13: #{tpu_custom_call.1} parent=11 // pred_check
          %p137 = pneg %p45
        $region14: #{tpu_custom_call.1} parent=11 // pred_check_branch
          %139 = sbr.rel (%p137) target = $region16
        $region15: #{tpu_custom_call.1} parent=11 // pred_region
          _
        $region16: #{tpu_custom_call.1} parent=11 // pred_fallthru
          _
        // Predicated region
        $region17: #{tpu_custom_call.1} parent=11 // pred_check
          %p140 = pneg %p66
        $region18: #{tpu_custom_call.1} parent=11 // pred_check_branch
          %142 = sbr.rel (%p140) target = $region20
        $region19: #{tpu_custom_call.1} parent=11 // pred_region
          _
        $region20: #{tpu_custom_call.1} parent=11 // pred_fallthru
          _
      $region12: #{tpu_custom_call.1} parent=5 // pred_fallthru
        _
      %p143 = scmp.lt.s32.totalorder %s12, 4
      // Predicated region
      $region21: #{tpu_custom_call.1} parent=5 // pred_check
        %p144 = pneg %p143
      $region22: #{tpu_custom_call.1} parent=5 // pred_check_branch
        %146 = sbr.rel (%p144) target = $region24
      $region23: #{tpu_custom_call.1} parent=5 // pred_region
        // Predicated region
        $region25: #{tpu_custom_call.1} parent=23 // pred_check
          %p147 = pneg %p88
        $region26: #{tpu_custom_call.1} parent=23 // pred_check_branch
          %149 = sbr.rel (%p147) target = $region28
        $region27: #{tpu_custom_call.1} parent=23 // pred_region
          %s150 = sand.u32 %s78, 1
          %s151 = sand.u32 %s78, 1
          %s152 = smul.addr %s151, 32
          %s153 = scalar_lea.vmem [#allocation2], %s152
          %s154 = smul.addr %s19, 8
          %s155 = sadd.s32 %s20, %s154
          %s156 = smul.addr %s155, 8
          %s157 = scalar_lea.vmem %s2, %s156
          // Predicated region
          $region29: #{tpu_custom_call.1} parent=27 // pred_check
            _
          $region30: #{tpu_custom_call.1} parent=27 // pred_check_branch
            %159 = sbr.rel (0) target = $region32
          $region31: #{tpu_custom_call.1} parent=27 // pred_region
            // Predicated region
            $region33: #{tpu_custom_call.1} parent=31 // pred_check
              _
            $region34: #{tpu_custom_call.1} parent=31 // pred_check_branch
              %161 = sbr.rel (0) target = $region36
            $region35: #{tpu_custom_call.1} parent=31 // pred_region
              // Predicated region
              $region48: #{tpu_custom_call.1} parent=35 // pred_check
                _
              $region49: #{tpu_custom_call.1} parent=35 // pred_check_branch
                %183 = sbr.rel (0) target = $region51
              $region50: #{tpu_custom_call.1} parent=35 // pred_region
                loop: start=0, step=1, limit=1
                $region52: #{tpu_custom_call.1} parent=50 // loop_pre_header
                  _
                $region53: #{tpu_custom_call.1} parent=50 // loop_header
                  %s185 = sphi 0, %s189
                  %p186 = scmp.ge.s32.totalorder %s185, 1
                  %s190 = sphi %s157, %s157
                  %s191 = sphi %s153, %s153
                $region54: #{tpu_custom_call.1} parent=50 // loop_header_branch
                  %188 = sbr.rel (%p186) target = $region58
                $region55: #{tpu_custom_call.1} parent=50 // loop_body
                  %v192 = vld [vmem:[%s190] sm:$0xff]
                  %193 = vst [vmem:[%s191] sm:$0xff] %v192
                  %v194 = vld [vmem:[%s190 + $0x10] sm:$0xff]
                  %195 = vst [vmem:[%s191 + $0x8] sm:$0xff] %v194
                  %v196 = vld [vmem:[%s190 + $0x20] sm:$0xff]
                  %197 = vst [vmem:[%s191 + $0x10] sm:$0xff] %v196
                  %v198 = vld [vmem:[%s190 + $0x30] sm:$0xff]
                  %199 = vst [vmem:[%s191 + $0x18] sm:$0xff] %v198
                $region56: #{tpu_custom_call.1} parent=50 // loop_footer
                  %s189 = sadd.s32 1, %s185
                $region57: #{tpu_custom_call.1} parent=50 // loop_footer_branch
                  %184 = sbr.rel target = $region53
                $region58: #{tpu_custom_call.1} parent=50 // loop_exit
                  _
              $region51: #{tpu_custom_call.1} parent=35 // pred_fallthru
                _
              // Predicated region
              $region59: #{tpu_custom_call.1} parent=35 // pred_check
                _
              $region60: #{tpu_custom_call.1} parent=35 // pred_check_branch
                %201 = sbr.rel target = $region62
              $region61: #{tpu_custom_call.1} parent=35 // pred_region
                _
              $region62: #{tpu_custom_call.1} parent=35 // pred_fallthru
                _
            $region36: #{tpu_custom_call.1} parent=31 // pred_fallthru
              _
            // Predicated region
            $region37: #{tpu_custom_call.1} parent=31 // pred_check
              _
            $region38: #{tpu_custom_call.1} parent=31 // pred_check_branch
              %163 = sbr.rel target = $region40
            $region39: #{tpu_custom_call.1} parent=31 // pred_region
              %s165 = ssub.s32 256, 1
              loop: start=0, step=1, limit=1
              $region41: #{tpu_custom_call.1} parent=39 // loop_pre_header
                _
              $region42: #{tpu_custom_call.1} parent=39 // loop_header
                %s167 = sphi 0, %s171
                %p168 = scmp.ge.s32.totalorder %s167, 1
                %s172 = sphi %s157, %s157
                %s173 = sphi %s153, %s153
              $region43: #{tpu_custom_call.1} parent=39 // loop_header_branch
                %170 = sbr.rel (%p168) target = $region47
              $region44: #{tpu_custom_call.1} parent=39 // loop_body
                %v174 = vld [vmem:[%s172] sm:%s165]
                %175 = vst [vmem:[%s173] sm:%s165] %v174
                %v176 = vld [vmem:[%s172 + $0x10] sm:%s165]
                %177 = vst [vmem:[%s173 + $0x8] sm:%s165] %v176
                %v178 = vld [vmem:[%s172 + $0x20] sm:%s165]
                %179 = vst [vmem:[%s173 + $0x10] sm:%s165] %v178
                %v180 = vld [vmem:[%s172 + $0x30] sm:%s165]
                %181 = vst [vmem:[%s173 + $0x18] sm:%s165] %v180
              $region45: #{tpu_custom_call.1} parent=39 // loop_footer
                %s171 = sadd.s32 1, %s167
              $region46: #{tpu_custom_call.1} parent=39 // loop_footer_branch
                %166 = sbr.rel target = $region42
              $region47: #{tpu_custom_call.1} parent=39 // loop_exit
                _
            $region40: #{tpu_custom_call.1} parent=31 // pred_fallthru
              _
          $region32: #{tpu_custom_call.1} parent=27 // pred_fallthru
            _
          %202 = vnop
        $region28: #{tpu_custom_call.1} parent=23 // pred_fallthru
          _
      $region24: #{tpu_custom_call.1} parent=5 // pred_fallthru
        _
      %p203 = scmp.le.s32.totalorder 1, %s12
      %p204 = scmp.lt.s32.totalorder %s12, 5
      %p205 = pnand %p203, %p204
      %p206 = pneg %p205
      // Predicated region
      $region63: #{tpu_custom_call.1} parent=5 // pred_check
        _
      $region64: #{tpu_custom_call.1} parent=5 // pred_check_branch
        %208 = sbr.rel (%p205) target = $region66
      $region65: #{tpu_custom_call.1} parent=5 // pred_region
        %s209 = ssub.s32 %s12, 1
        %s210 = sand.u32 %s81, 1
        %s211 = sand.u32 %s81, 1
        %s212 = smul.addr %s211, 32
        %s213 = scalar_lea.vmem [#allocation2], %s212
        // Predicated region
        $region67: #{tpu_custom_call.1} parent=65 // pred_check
          %p214 = pneg %p94
        $region68: #{tpu_custom_call.1} parent=65 // pred_check_branch
          %216 = sbr.rel (%p214) target = $region70
        $region69: #{tpu_custom_call.1} parent=65 // pred_region
          _
        $region70: #{tpu_custom_call.1} parent=65 // pred_fallthru
          _
        %p217 = pneg %p45
        %p218 = pneg %p42
        %p219 = pneg %p66
        %p220 = pneg %p63
        %s221 = sand.u32 %s81, 1
        %s222 = sand.u32 %s81, 1
        %s223 = smul.addr %s222, 32
        %s224 = scalar_lea.vmem [#allocation2], %s223
        %p225 = pneg %p94
        %p226 = pneg %p91
        %p227 = pneg %p122
        %p228 = pneg %p119
        %s229 = sand.u32 %s109, 1
        %s230 = scalar_lea.sflag [#allocation4], %s229
        %s231 = sand.u32 %s109, 1
        %s232 = smul.addr %s231, 8
        %s233 = scalar_lea.vmem [#allocation3], %s232
        %v234 = vld [vmem:[%s0] sm:$0xff]
        %v235 = vld [vmem:[%s213] sm:$0xff]
        %v236 = vld [vmem:[%s213 + $0x8] sm:$0xff]
        %v237 = vld [vmem:[%s213 + $0x10] sm:$0xff]
        %v238 = vld [vmem:[%s213 + $0x18] sm:$0xf]
        %v239 = vld [vmem:[%s1] sm:$0xff]
        %241 = vset.pattern.permute.xlu0 0
        %242 = vperm.xlu0 %241, %v239
        %v243 = vpop.permute.xlu0 %242
        %vm245 = vcmask 228352
        %v247 = vsel %vm245, %v234, 0
        %vm249 = vcmask 1043456
        %v251 = vsel %vm249, %v238, 0
        %253 = vmatprep.subr.mxu0 0.0
        %254 = vmatpush1.msra.mxu0 0.0
        %255 = vmatprep.subr.mxu0 0.0
        %256 = vmatpush1.msra.mxu0 0.0
        %257 = vmatprep.subr.mxu0 0.0
        %258 = vmatpush1.msra.mxu0 0.0
        %259 = vmatprep.subr.mxu0 0.0
        %260 = vmatpush1.msra.mxu0 0.0
        %261 = vmatprep.subr.mxu0 0.0
        %262 = vmatpush1.msra.mxu0 0.0
        %263 = vmatprep.subr.mxu0 0.0
        %264 = vmatpush1.msra.mxu0 0.0
        %265 = vmatprep.subr.mxu0 0.0
        %266 = vmatpush1.msra.mxu0 0.0
        %267 = vmatprep.subr.mxu0 0.0
        %268 = vmatpush1.msra.mxu0 0.0
        %269 = vmatprep.subr.mxu0 0.0
        %270 = vmatpush1.msra.mxu0 0.0
        %271 = vmatprep.subr.mxu0 0.0
        %272 = vmatpush1.msra.mxu0 0.0
        %273 = vmatprep.subr.mxu0 0.0
        %274 = vmatpush1.msra.mxu0 0.0
        %275 = vmatprep.subr.mxu0 0.0
        %276 = vmatpush1.msra.mxu0 0.0
        %277 = vmatprep.subr.mxu0 0.0
        %278 = vmatpush1.msra.mxu0 %v251
        %279 = vmatprep.subr.mxu0 0.0
        %280 = vmatpush1.msra.mxu0 %v237
        %281 = vmatprep.subr.mxu0 0.0
        %282 = vmatpush1.msra.mxu0 %v236
        %283 = vmatprep.subr.mxu0 0.0
        %284 = vmatpush1.msra.mxu0 %v235
        %285 = vmatprep.subr.mxu0 0.0
        %286 = vmatpush2.msra.mxu0 0.0
        %287 = vmatprep.subr.mxu0 0.0
        %288 = vmatpush2.msra.mxu0 0.0
        %289 = vmatprep.subr.mxu0 0.0
        %290 = vmatpush2.msra.mxu0 0.0
        %291 = vmatprep.subr.mxu0 0.0
        %292 = vmatpush2.msra.mxu0 0.0
        %293 = vmatprep.subr.mxu0 0.0
        %294 = vmatpush2.msra.mxu0 0.0
        %295 = vmatprep.subr.mxu0 0.0
        %296 = vmatpush2.msra.mxu0 0.0
        %297 = vmatprep.subr.mxu0 0.0
        %298 = vmatpush2.msra.mxu0 0.0
        %299 = vmatprep.subr.mxu0 0.0
        %300 = vmatpush2.msra.mxu0 0.0
        %301 = vmatprep.subr.mxu0 0.0
        %302 = vmatpush2.msra.mxu0 0.0
        %303 = vmatprep.subr.mxu0 0.0
        %304 = vmatpush2.msra.mxu0 0.0
        %305 = vmatprep.subr.mxu0 0.0
        %306 = vmatpush2.msra.mxu0 0.0
        %307 = vmatprep.subr.mxu0 0.0
        %308 = vmatpush2.msra.mxu0 0.0
        %309 = vmatprep.subr.mxu0 0.0
        %310 = vmatpush2.msra.mxu0 0.0
        %311 = vmatprep.subr.mxu0 0.0
        %312 = vmatpush2.msra.mxu0 0.0
        %313 = vmatprep.subr.mxu0 0.0
        %314 = vmatpush2.msra.mxu0 0.0
        %315 = vmatprep.subr.mxu0 0.0
        %316 = vmatpush2.msra.mxu0 0.0
        %317 = vmatprep.mubr.f32.mxu0 0.0
        %318 = vmatmul.mubr.f32.gmra.mxu0 %v247
        %v319 = vpop.f32.mrf.mxu0
        %v320 = vadd.f32 %v243, %v319
        %v321 = vpop.f32.mrf.mxu0
        %322 = vdwg.mxu0
        %v323 = vmax.f32 %v320, 0.0
        %324 = vst [vmem:[%s233] sm:$0xff] %v323
        %s325 = sand.u32 %s109, 1
        %s326 = scalar_lea.sflag [#allocation4], %s325
        %s327 = sand.u32 %s109, 1
        %s328 = smul.addr %s327, 8
        %s329 = scalar_lea.vmem [#allocation3], %s328
        // Predicated region
        $region71: #{tpu_custom_call.1} parent=65 // pred_check
          %p330 = pneg %p119
        $region72: #{tpu_custom_call.1} parent=65 // pred_check_branch
          %332 = sbr.rel (%p330) target = $region74
        $region73: #{tpu_custom_call.1} parent=65 // pred_region
          %s334 = ssub.s32 128, 128
          %335 = vsyncadd %s326, %s334
          %s336 = smul.addr %s21, 2
          %s337 = sadd.s32 %s22, %s336
          %s338 = smul.addr %s337, 128
          %s339 = scalar_lea.hbm %s3, %s338
          %s341 = sshll.u32 %s329, 4
          %s342 = int_to_ptr.vmem [resolvable:$true] %s341
          %344 = dma.vmem_to_hbm [thread:$0]  %s342, 128, %s339, %s326
        $region74: #{tpu_custom_call.1} parent=65 // pred_fallthru
          _
      $region66: #{tpu_custom_call.1} parent=5 // pred_fallthru
        _
      %p345 = scmp.le.s32.totalorder 2, %s12
      // Predicated region
      $region75: #{tpu_custom_call.1} parent=5 // pred_check
        %p346 = pneg %p345
      $region76: #{tpu_custom_call.1} parent=5 // pred_check_branch
        %348 = sbr.rel (%p346) target = $region78
      $region77: #{tpu_custom_call.1} parent=5 // pred_region
        %s349 = ssub.s32 %s12, 2
        // Predicated region
        $region79: #{tpu_custom_call.1} parent=77 // pred_check
          %p350 = pneg %p125
        $region80: #{tpu_custom_call.1} parent=77 // pred_check_branch
          %352 = sbr.rel (%p350) target = $region82
        $region81: #{tpu_custom_call.1} parent=77 // pred_region
          %s353 = sand.u32 %s110, 1
          %s354 = scalar_lea.sflag [#allocation4], %s353
          %s355 = sand.u32 %s110, 1
          %s356 = smul.addr %s355, 8
          %s357 = scalar_lea.vmem [#allocation3], %s356
          %358 = dma.done %s354, 128
        $region82: #{tpu_custom_call.1} parent=77 // pred_fallthru
          _
      $region78: #{tpu_custom_call.1} parent=5 // pred_fallthru
        _
    $region6: #{tpu_custom_call.1} parent=1 // loop_footer
      %s16 = sadd.s32 1, %s12
    $region7: #{tpu_custom_call.1} parent=1 // loop_footer_branch
      %11 = sbr.rel target = $region3
    $region8: #{tpu_custom_call.1} parent=1 // loop_exit
      _
    %359 = vsyncpa [#allocation4], 1
    %s360 = scalar_lea.sflag [#allocation4], 1
    %361 = vsyncpa %s360, 1

</llo_original>
